<compile_context>
chip_gen: v7x
topology: tpu7x:2x2x1
jax: 0.10.0
libtpu: 0.0.40
codegen_flags: <defaults>
</compile_context>

<pallas_src>
import functools
import math

import jax
import jax.numpy as jnp
from jax.experimental import pallas as pl
from jax.experimental.pallas import tpu as pltpu


# ----------------------------- helpers -----------------------------

def _pick_tile(dim, candidates):
    """Largest candidate that evenly divides `dim`; fall back to full dim."""
    for c in candidates:
        if c <= dim and dim % c == 0:
            return c
    return dim


def _nbytes(shape, dtype):
    return math.prod(shape) * jnp.dtype(dtype).itemsize


def _compiler_params(dims, *tile_bytes, scratch=0):
    """Footprint-derived VMEM limit: double-buffered pipelined tiles + scratch
    + headroom, capped at 32 MiB so it stays safe on v7x (64 MiB physical)."""
    need = 2 * sum(tile_bytes) + scratch + (2 << 20)
    limit = int(min(max(need, 8 << 20), 32 << 20))
    return pltpu.CompilerParams(dimension_semantics=dims, vmem_limit_bytes=limit)


def _apply_act(y, activation):
    if activation == "gelu":
        # TODO(synk): exact erf-GELU if strict HuggingFace parity is required.
        return jax.nn.gelu(y, approximate=True)
    if activation == "tanh":
        return jnp.tanh(y)
    return y


# ----------------------------- linear (x @ w + b) -----------------------------

def _linear_kernel_1k(x_ref, w_ref, b_ref, o_ref, *, activation):
    # whole K fits one tile: no scratch accumulator, no zero-init pass
    y = jnp.dot(x_ref[...], w_ref[...], preferred_element_type=jnp.float32)
    y = y + b_ref[...].astype(jnp.float32)
    o_ref[...] = _apply_act(y, activation).astype(o_ref.dtype)


def _linear_kernel_acc(x_ref, w_ref, b_ref, o_ref, acc_ref, *, activation):
    @pl.when(pl.program_id(2) == 0)
    def _():
        acc_ref[...] = jnp.zeros_like(acc_ref)

    acc_ref[...] += jnp.dot(x_ref[...], w_ref[...],
                            preferred_element_type=jnp.float32)

    @pl.when(pl.program_id(2) == pl.num_programs(2) - 1)
    def _():
        y = acc_ref[...] + b_ref[...].astype(jnp.float32)
        o_ref[...] = _apply_act(y, activation).astype(o_ref.dtype)


def linear(x, w, b, activation=None):
    """y = x @ w + b (optionally fused activation). x: (M,K) bf16, w: (K,N) bf16, b: (N,) f32."""
    M, K = x.shape
    Kw, N = w.shape
    assert K == Kw
    tm = _pick_tile(M, (2048, 1024, 512, 256, 128, 64, 32, 16, 8))
    tn = _pick_tile(N, (768, 512, 256, 128))
    tk = K if K <= 1536 else _pick_tile(K, (1536, 1024, 768, 512, 256, 128))
    kg = K // tk
    b2 = b.reshape(1, N)
    tile_bytes = (_nbytes((tm, tk), x.dtype), _nbytes((tk, tn), w.dtype),
                  _nbytes((1, tn), jnp.float32), _nbytes((tm, tn), x.dtype))

    if kg == 1:
        return pl.pallas_call(
            functools.partial(_linear_kernel_1k, activation=activation),
            out_shape=jax.ShapeDtypeStruct((M, N), x.dtype),
            grid=(M // tm, N // tn),
            in_specs=[
                pl.BlockSpec((tm, K), lambda i, j: (i, 0)),
                pl.BlockSpec((K, tn), lambda i, j: (0, j)),
                pl.BlockSpec((1, tn), lambda i, j: (0, j)),
            ],
            out_specs=pl.BlockSpec((tm, tn), lambda i, j: (i, j)),
            compiler_params=_compiler_params(("parallel", "parallel"), *tile_bytes),
        )(x, w, b2)

    return pl.pallas_call(
        functools.partial(_linear_kernel_acc, activation=activation),
        out_shape=jax.ShapeDtypeStruct((M, N), x.dtype),
        grid=(M // tm, N // tn, kg),
        in_specs=[
            pl.BlockSpec((tm, tk), lambda i, j, k: (i, k)),
            pl.BlockSpec((tk, tn), lambda i, j, k: (k, j)),
            pl.BlockSpec((1, tn), lambda i, j, k: (0, j)),
        ],
        out_specs=pl.BlockSpec((tm, tn), lambda i, j, k: (i, j)),
        scratch_shapes=[pltpu.VMEM((tm, tn), jnp.float32)],
        compiler_params=_compiler_params(
            ("parallel", "parallel", "arbitrary"), *tile_bytes,
            scratch=_nbytes((tm, tn), jnp.float32)),
    )(x, w, b2)


# ---------------- linear + residual add + LayerNorm (fused epilogue) ----------------

def _ln_rows(y_f32, g_ref, b_ref, eps):
    mu = jnp.mean(y_f32, axis=-1, keepdims=True)
    yc = y_f32 - mu
    var = jnp.mean(yc * yc, axis=-1, keepdims=True)
    yn = yc * jax.lax.rsqrt(var + eps)
    return yn * g_ref[...].astype(jnp.float32) + b_ref[...].astype(jnp.float32)


def _linear_add_ln_kernel_1k(x_ref, w_ref, b_ref, r_ref, g_ref, bt_ref, o_ref, *, eps):
    y = jnp.dot(x_ref[...], w_ref[...], preferred_element_type=jnp.float32)
    y = y + b_ref[...].astype(jnp.float32) + r_ref[...].astype(jnp.float32)
    o_ref[...] = _ln_rows(y, g_ref, bt_ref, eps).astype(o_ref.dtype)


def _linear_add_ln_kernel_acc(x_ref, w_ref, b_ref, r_ref, g_ref, bt_ref, o_ref,
                              acc_ref, *, eps):
    @pl.when(pl.program_id(1) == 0)
    def _():
        acc_ref[...] = jnp.zeros_like(acc_ref)

    acc_ref[...] += jnp.dot(x_ref[...], w_ref[...],
                            preferred_element_type=jnp.float32)

    @pl.when(pl.program_id(1) == pl.num_programs(1) - 1)
    def _():
        y = acc_ref[...] + b_ref[...].astype(jnp.float32) + r_ref[...].astype(jnp.float32)
        o_ref[...] = _ln_rows(y, g_ref, bt_ref, eps).astype(o_ref.dtype)


def linear_add_ln(x, w, b, residual, gamma, beta, eps=1e-12):
    """LayerNorm(residual + x @ w + b).  The full output width N (=H, a multiple of
    128 lanes) is a single block so the matmul epilogue sees whole rows for mean/var."""
    M, K = x.shape
    Kw, N = w.shape
    assert K == Kw and residual.shape == (M, N)
    tm = _pick_tile(M, (1024, 512, 256, 128, 64, 32, 16, 8))
    tk = K if K <= 1536 else _pick_tile(K, (1536, 1024, 768, 512, 256, 128))
    kg = K // tk
    b2, g2, bt2 = b.reshape(1, N), gamma.reshape(1, N), beta.reshape(1, N)
    tile_bytes = (_nbytes((tm, tk), x.dtype), _nbytes((tk, N), w.dtype),
                  _nbytes((tm, N), residual.dtype), _nbytes((tm, N), x.dtype),
                  3 * _nbytes((1, N), jnp.float32))

    if kg == 1:
        return pl.pallas_call(
            functools.partial(_linear_add_ln_kernel_1k, eps=eps),
            out_shape=jax.ShapeDtypeStruct((M, N), x.dtype),
            grid=(M // tm,),
            in_specs=[
                pl.BlockSpec((tm, K), lambda i: (i, 0)),
                pl.BlockSpec((K, N), lambda i: (0, 0)),
                pl.BlockSpec((1, N), lambda i: (0, 0)),
                pl.BlockSpec((tm, N), lambda i: (i, 0)),
                pl.BlockSpec((1, N), lambda i: (0, 0)),
                pl.BlockSpec((1, N), lambda i: (0, 0)),
            ],
            out_specs=pl.BlockSpec((tm, N), lambda i: (i, 0)),
            compiler_params=_compiler_params(("parallel",), *tile_bytes),
        )(x, w, b2, residual, g2, bt2)

    return pl.pallas_call(
        functools.partial(_linear_add_ln_kernel_acc, eps=eps),
        out_shape=jax.ShapeDtypeStruct((M, N), x.dtype),
        grid=(M // tm, kg),
        in_specs=[
            pl.BlockSpec((tm, tk), lambda i, k: (i, k)),
            pl.BlockSpec((tk, N), lambda i, k: (k, 0)),
            pl.BlockSpec((1, N), lambda i, k: (0, 0)),
            pl.BlockSpec((tm, N), lambda i, k: (i, 0)),
            pl.BlockSpec((1, N), lambda i, k: (0, 0)),
            pl.BlockSpec((1, N), lambda i, k: (0, 0)),
        ],
        out_specs=pl.BlockSpec((tm, N), lambda i, k: (i, 0)),
        scratch_shapes=[pltpu.VMEM((tm, N), jnp.float32)],
        compiler_params=_compiler_params(
            ("parallel", "arbitrary"), *tile_bytes,
            scratch=_nbytes((tm, N), jnp.float32)),
    )(x, w, b2, residual, g2, bt2)


# ----------------------------- layernorm (embeddings only) -----------------------------

def _ln_kernel(x_ref, g_ref, b_ref, o_ref, *, eps):
    o_ref[...] = _ln_rows(x_ref[...].astype(jnp.float32), g_ref, b_ref, eps).astype(o_ref.dtype)


def layernorm(x, g, b, eps=1e-12):
    M, H = x.shape
    tm = _pick_tile(M, (1024, 512, 256, 128, 64, 32, 16, 8))
    tile_bytes = (_nbytes((tm, H), x.dtype), 2 * _nbytes((1, H), jnp.float32),
                  _nbytes((tm, H), x.dtype))
    return pl.pallas_call(
        functools.partial(_ln_kernel, eps=eps),
        out_shape=jax.ShapeDtypeStruct((M, H), x.dtype),
        grid=(M // tm,),
        in_specs=[
            pl.BlockSpec((tm, H), lambda i: (i, 0)),
            pl.BlockSpec((1, H), lambda i: (0, 0)),
            pl.BlockSpec((1, H), lambda i: (0, 0)),
        ],
        out_specs=pl.BlockSpec((tm, H), lambda i: (i, 0)),
        compiler_params=_compiler_params(("parallel",), *tile_bytes),
    )(x, g.reshape(1, H), b.reshape(1, H))


# ----------------------------- attention -----------------------------

def _attn_kernel(qkv_ref, m_ref, o_ref, *, nH, hd, scale):
    """qkv: (1, S, 3H) bf16 lane-dense block (one batch element);
    m: (1, 1, S) f32 additive mask; o: (1, S, H) bf16 lane-dense block.
    Heads are split with static lane slices inside the kernel (no XLA transposes)."""
    H = nH * hd
    qkv = qkv_ref[0]                        # (S, 3H)
    mask = m_ref[0]                         # (1, S), broadcast over heads & rows
    outs = []
    for h in range(nH):
        q = qkv[:, h * hd:(h + 1) * hd]
        k = qkv[:, H + h * hd:H + (h + 1) * hd]
        v = qkv[:, 2 * H + h * hd:2 * H + (h + 1) * hd]
        # scale Q (S*hd mults) instead of the S*S score matrix
        q = q * jnp.asarray(scale, dtype=q.dtype)
        s = jax.lax.dot_general(q, k, (((1,), (1,)), ((), ())),
                                preferred_element_type=jnp.float32)
        s = s + mask
        s = s - jnp.max(s, axis=-1, keepdims=True)
        p = jnp.exp(s)
        inv = pl.reciprocal(jnp.sum(p, axis=-1, keepdims=True), approx=True)
        o = jnp.dot(p.astype(v.dtype), v, preferred_element_type=jnp.float32)
        outs.append((o * inv).astype(o_ref.dtype))
    o_ref[0] = jnp.concatenate(outs, axis=-1)


def attention(qkv, add_mask, nH):
    """qkv: (B, S, 3H) bf16 (fused QKV projection, reshaped for free);
    add_mask: (B, 1, S) f32 additive (0 / -1e4).  Returns (B, S, H) bf16."""
    B, S, threeH = qkv.shape
    H = threeH // 3
    hd = H // nH
    scale = 1.0 / (hd ** 0.5)
    # one batch element per grid step bounds live softmax state to a single S x S
    # head at a time (VMEM-safe on v7x), while all HBM blocks stay lane-dense.
    tile_bytes = (_nbytes((1, S, threeH), qkv.dtype),
                  _nbytes((1, 1, S), jnp.float32),
                  _nbytes((1, S, H), qkv.dtype))
    intermediates = 3 * _nbytes((S, S), jnp.float32) + _nbytes((S, H), jnp.float32)
    return pl.pallas_call(
        functools.partial(_attn_kernel, nH=nH, hd=hd, scale=scale),
        out_shape=jax.ShapeDtypeStruct((B, S, H), qkv.dtype),
        grid=(B,),
        in_specs=[
            pl.BlockSpec((1, S, threeH), lambda b: (b, 0, 0)),
            pl.BlockSpec((1, 1, S), lambda b: (b, 0, 0)),
        ],
        out_specs=pl.BlockSpec((1, S, H), lambda b: (b, 0, 0)),
        compiler_params=_compiler_params(("parallel",), *tile_bytes,
                                         scratch=intermediates),
    )(qkv, add_mask)


def head_linear(x, w, b):
    """Tiny task heads / pooler-sized matmuls: plain JAX f32 (Pallas launch is pure overhead)."""
    return jnp.dot(x.astype(jnp.float32), w.astype(jnp.float32),
                   preferred_element_type=jnp.float32) + b


# ----------------------------- parameter init -----------------------------

def init_params(key, cfg):
    H, I = cfg["hidden"], cfg["intermediate"]
    cdt = cfg.get("dtype", jnp.bfloat16)

    def nrm(k, shape, std=0.02, dtype=None):
        return (std * jax.random.normal(k, shape, jnp.float32)).astype(dtype or cdt)

    keys = iter(jax.random.split(key, 256))
    p = {
        "word_emb": nrm(next(keys), (cfg["vocab"], H)),
        "pos_emb": nrm(next(keys), (cfg["max_pos"], H)),
        "type_emb": nrm(next(keys), (2, H)),
        "emb_ln_g": jnp.ones((H,), jnp.float32),
        "emb_ln_b": jnp.zeros((H,), jnp.float32),
        "layers": [],
        "pool_w": nrm(next(keys), (H, H)),
        "pool_b": jnp.zeros((H,), jnp.float32),
        # task heads (shapes from MultitaskBERT.__init__); kept in f32 / plain JAX
        "sst_w": nrm(next(keys), (H, cfg["num_labels"]), dtype=jnp.float32),
        "sst_b": jnp.zeros((cfg["num_labels"],), jnp.float32),
        "para_w": nrm(next(keys), (H, 1), dtype=jnp.float32),
        "para_b": jnp.zeros((1,), jnp.float32),
        "para_siam_w": nrm(next(keys), (2 * H, 1), dtype=jnp.float32),
        "para_siam_b": jnp.zeros((1,), jnp.float32),
        "sts_w": nrm(next(keys), (H, 1), dtype=jnp.float32),
        "sts_b": jnp.zeros((1,), jnp.float32),
        "sts_siam_w": nrm(next(keys), (2 * H, 1), dtype=jnp.float32),
        "sts_siam_b": jnp.zeros((1,), jnp.float32),
    }
    for _ in range(cfg["layers"]):
        lp = {
            # fused Q|K|V projection: (H, 3H) weight, (3H,) bias
            "wqkv": nrm(next(keys), (H, 3 * H)),
            "bqkv": jnp.zeros((3 * H,), jnp.float32),
            "wo": nrm(next(keys), (H, H)), "bo": jnp.zeros((H,), jnp.float32),
            "ln1_g": jnp.ones((H,), jnp.float32), "ln1_b": jnp.zeros((H,), jnp.float32),
            "w1": nrm(next(keys), (H, I)), "b1": jnp.zeros((I,), jnp.float32),
            "w2": nrm(next(keys), (I, H)), "b2": jnp.zeros((H,), jnp.float32),
            "ln2_g": jnp.ones((H,), jnp.float32), "ln2_b": jnp.zeros((H,), jnp.float32),
        }
        p["layers"].append(lp)
    return p


# ----------------------------- BERT encoder -----------------------------

def bert_encode(params, input_ids, attention_mask, cfg):
    B, S = input_ids.shape
    H, nH = cfg["hidden"], cfg["heads"]

    # embeddings (gather stays in plain JAX glue); token_type_ids == 0 everywhere
    x = (params["word_emb"][input_ids]
         + params["pos_emb"][:S][None, :, :]
         + params["type_emb"][0][None, None, :])
    x = x.reshape(B * S, H)
    x = layernorm(x, params["emb_ln_g"], params["emb_ln_b"])

    # additive attention mask, one row per batch, broadcast over heads in-kernel
    add_mask = (1.0 - attention_mask.astype(jnp.float32))[:, None, :] * -10000.0  # (B,1,S)

    for lp in params["layers"]:
        # fused QKV projection: one matmul, x read once
        qkv = linear(x, lp["wqkv"], lp["bqkv"])                       # (B*S, 3H)
        ctx = attention(qkv.reshape(B, S, 3 * H), add_mask, nH)       # (B, S, H)
        # wo matmul with residual-add + LayerNorm fused into its epilogue
        x = linear_add_ln(ctx.reshape(B * S, H), lp["wo"], lp["bo"],
                          x, lp["ln1_g"], lp["ln1_b"])
        h = linear(x, lp["w1"], lp["b1"], activation="gelu")
        # w2 matmul with residual-add + LayerNorm fused into its epilogue
        x = linear_add_ln(h, lp["w2"], lp["b2"],
                          x, lp["ln2_g"], lp["ln2_b"])

    last_hidden = x.reshape(B, S, H)
    cls = last_hidden[:, 0, :]
    # pooler: M = B rows -> plain JAX f32 (a Pallas launch would be masked-sublane overhead)
    pooler = jnp.tanh(head_linear(cls, params["pool_w"], params["pool_b"]))
    return {"last_hidden_state": last_hidden, "pooler_output": pooler}


# ----------------------------- MultitaskBERT -----------------------------

class MultitaskBERT:
    def __init__(self, params, cfg):
        self.params = params
        self.cfg = cfg
        self.num_labels = cfg["num_labels"]
        self.siamese = cfg["siamese"]
        # dropout(p) -> identity at inference time

    def forward(self, input_ids, attention_mask):
        return bert_encode(self.params, input_ids, attention_mask, self.cfg)

    def predict_sentiment(self, input_ids, attention_mask):
        pooled = self.forward(input_ids, attention_mask)["pooler_output"]
        return head_linear(pooled, self.params["sst_w"], self.params["sst_b"])

    def predict_paraphrase(self, ids1, mask1, ids2, mask2):
        if not self.siamese:
            # matches the reference: non-siamese path only consumes sentence 1
            pooled = self.forward(ids1, mask1)["pooler_output"]
            return jnp.squeeze(
                head_linear(pooled, self.params["para_w"], self.params["para_b"]), axis=-1)
        p1 = self.forward(ids1, mask1)["pooler_output"]
        p2 = self.forward(ids2, mask2)["pooler_output"]
        cat = jnp.concatenate([p1, p2], axis=1)
        return jnp.squeeze(
            head_linear(cat, self.params["para_siam_w"], self.params["para_siam_b"]), axis=-1)

    def predict_similarity(self, ids1, mask1, ids2, mask2):
        if not self.siamese:
            pooled = self.forward(ids1, mask1)["pooler_output"]
            return jnp.squeeze(
                head_linear(pooled, self.params["sts_w"], self.params["sts_b"]), axis=-1)
        p1 = self.forward(ids1, mask1)["pooler_output"]
        p2 = self.forward(ids2, mask2)["pooler_output"]
        cat = jnp.concatenate([p1, p2], axis=1)
        return jnp.squeeze(
            head_linear(cat, self.params["sts_siam_w"], self.params["sts_siam_b"]), axis=-1)


# ----------------------------- demo -----------------------------

if __name__ == "__main__":
    cfg = dict(vocab=64, hidden=128, heads=4, layers=2, intermediate=512,
               max_pos=32, num_labels=5, siamese=True, dtype=jnp.bfloat16)

    key = jax.random.PRNGKey(0)
    pkey, k1, k2 = jax.random.split(key, 3)
    params = init_params(pkey, cfg)

    B, S = 2, 8
    input_ids_1 = jax.random.randint(k1, (B, S), 0, cfg["vocab"], dtype=jnp.int32)
    input_ids_2 = jax.random.randint(k2, (B, S), 0, cfg["vocab"], dtype=jnp.int32)
    attention_mask_1 = jnp.ones((B, S), jnp.int32).at[:, 6:].set(0)
    attention_mask_2 = jnp.ones((B, S), jnp.int32).at[0, 5:].set(0)

    model = MultitaskBERT(params, cfg)

    sst_logits = model.predict_sentiment(input_ids_1, attention_mask_1)
    para_logit = model.predict_paraphrase(input_ids_1, attention_mask_1,
                                          input_ids_2, attention_mask_2)
    sts_logit = model.predict_similarity(input_ids_1, attention_mask_1,
                                         input_ids_2, attention_mask_2)

    jax.block_until_ready((sst_logits, para_logit, sts_logit))

    assert sst_logits.shape == (B, cfg["num_labels"])
    assert para_logit.shape == (B,)
    assert sts_logit.shape == (B,)
    assert jnp.all(jnp.isfinite(sst_logits.astype(jnp.float32)))
    assert jnp.all(jnp.isfinite(para_logit.astype(jnp.float32)))
    assert jnp.all(jnp.isfinite(sts_logit.astype(jnp.float32)))

    print("KERNEL_OK")
</pallas_src>

<mosaic_0001>
module attributes {stable_mosaic.version = 11 : i64} {
  func.func @_ln_kernel(%arg0: i32, %arg1: memref<16x128xbf16, #tpu.memory_space<vmem>>, %arg2: memref<1x128xf32, #tpu.memory_space<vmem>>, %arg3: memref<1x128xf32, #tpu.memory_space<vmem>>, %arg4: memref<16x128xbf16, #tpu.memory_space<vmem>>) attributes {dimension_semantics = [#tpu.dimension_semantics<parallel>], iteration_bounds = array<i64: 1>, scalar_prefetch = 0 : i64, scratch_operands = 0 : i64, tpu.core_type = #tpu.core_type<tc>, window_params = [{transform_indices = @transform_0, window_bounds = array<i64: 16, 128>}, {pipeline_mode = #tpu.pipeline_mode<synchronous>, transform_indices = @transform_1, window_bounds = array<i64: 1, 128>}, {pipeline_mode = #tpu.pipeline_mode<synchronous>, transform_indices = @transform_2, window_bounds = array<i64: 1, 128>}, {transform_indices = @transform_3, window_bounds = array<i64: 16, 128>}]} {
    %c0 = arith.constant 0 : index
    %c0_0 = arith.constant 0 : index
    %0 = vector.load %arg1[%c0, %c0_0] : memref<16x128xbf16, #tpu.memory_space<vmem>>, vector<16x128xbf16>
    %1 = arith.extf %0 : vector<16x128xbf16> to vector<16x128xf32>
    %cst = arith.constant dense<0.000000e+00> : vector<16xf32>
    %2 = vector.multi_reduction <add>, %1, %cst [1] : vector<16x128xf32> to vector<16xf32>
    %3 = vector.shape_cast %2 : vector<16xf32> to vector<16x1xf32>
    %cst_1 = arith.constant 1.280000e+02 : f32
    %4 = vector.broadcast %cst_1 : f32 to vector<16x1xf32>
    %5 = arith.divf %3, %4 : vector<16x1xf32>
    %6 = vector.broadcast %5 : vector<16x1xf32> to vector<16x128xf32>
    %7 = arith.subf %1, %6 : vector<16x128xf32>
    %8 = arith.mulf %7, %7 : vector<16x128xf32>
    %cst_2 = arith.constant dense<0.000000e+00> : vector<16xf32>
    %9 = vector.multi_reduction <add>, %8, %cst_2 [1] : vector<16x128xf32> to vector<16xf32>
    %10 = vector.shape_cast %9 : vector<16xf32> to vector<16x1xf32>
    %cst_3 = arith.constant 1.280000e+02 : f32
    %11 = vector.broadcast %cst_3 : f32 to vector<16x1xf32>
    %12 = arith.divf %10, %11 : vector<16x1xf32>
    %cst_4 = arith.constant 9.99999996E-13 : f32
    %13 = vector.broadcast %cst_4 : f32 to vector<16x1xf32>
    %14 = arith.addf %12, %13 : vector<16x1xf32>
    %15 = math.rsqrt %14 : vector<16x1xf32>
    %16 = vector.broadcast %15 : vector<16x1xf32> to vector<16x128xf32>
    %17 = arith.mulf %7, %16 : vector<16x128xf32>
    %c0_5 = arith.constant 0 : index
    %c0_6 = arith.constant 0 : index
    %18 = vector.load %arg2[%c0_5, %c0_6] : memref<1x128xf32, #tpu.memory_space<vmem>>, vector<1x128xf32>
    %19 = vector.broadcast %18 : vector<1x128xf32> to vector<16x128xf32>
    %20 = arith.mulf %17, %19 : vector<16x128xf32>
    %c0_7 = arith.constant 0 : index
    %c0_8 = arith.constant 0 : index
    %21 = vector.load %arg3[%c0_7, %c0_8] : memref<1x128xf32, #tpu.memory_space<vmem>>, vector<1x128xf32>
    %22 = vector.broadcast %21 : vector<1x128xf32> to vector<16x128xf32>
    %23 = arith.addf %20, %22 : vector<16x128xf32>
    %24 = arith.truncf %23 : vector<16x128xf32> to vector<16x128xbf16>
    %c0_9 = arith.constant 0 : index
    %c0_10 = arith.constant 0 : index
    %25 = vector.load %arg4[%c0_9, %c0_10] : memref<16x128xbf16, #tpu.memory_space<vmem>>, vector<16x128xbf16>
    tpu.vector_store %arg4[%c0_9, %c0_10], %24 {strides = array<i32>} : memref<16x128xbf16, #tpu.memory_space<vmem>>, vector<16x128xbf16>,
    return
  }
  func.func @transform_0(%arg0: i32) -> (i32, i32) {
    %c0_i32 = arith.constant 0 : i32
    %c0_i32_0 = arith.constant 0 : i32
    return %arg0, %c0_i32 : i32, i32
  }
  func.func @transform_1(%arg0: i32) -> (i32, i32) {
    %c0_i32 = arith.constant 0 : i32
    %c0_i32_0 = arith.constant 0 : i32
    %c0_i32_1 = arith.constant 0 : i32
    return %c0_i32, %c0_i32_0 : i32, i32
  }
  func.func @transform_2(%arg0: i32) -> (i32, i32) {
    %c0_i32 = arith.constant 0 : i32
    %c0_i32_0 = arith.constant 0 : i32
    %c0_i32_1 = arith.constant 0 : i32
    return %c0_i32, %c0_i32_0 : i32, i32
  }
  func.func @transform_3(%arg0: i32) -> (i32, i32) {
    %c0_i32 = arith.constant 0 : i32
    %c0_i32_0 = arith.constant 0 : i32
    return %arg0, %c0_i32 : i32, i32
  }
}

</mosaic_0001>

<llo_original>
// kernel: tpu_custom_call.1
$region0: #{tpu_custom_call.1}
  #allocation0 [shape = 'u32[]', space=smem, size = 0x4, offset = 0x4, fixed_abs, tag = 'smem constant byte address 0x4 - core index']
  #allocation1 [shape = 'u32[144,128]{1,0:T(1,128)}', space=vmem, size = 0x12000, scoped, tag = 'internal scratch']
  %s0 = inlined_call_operand.hbm [shape: bf16[16,128], index: 0, kind: input, shape index: {}]
  %s1 = inlined_call_operand.vmem [shape: f32[1,128], index: 1, kind: input, shape index: {}]
  %s2 = inlined_call_operand.vmem [shape: f32[1,128], index: 2, kind: input, shape index: {}]
  %s3 = inlined_call_operand.hbm [shape: bf16[16,128], index: 3, kind: output, shape index: {}]
  %s4 = sld [smem:[#allocation0]]
  $region26: #{tpu_custom_call.1} parent=0
    _
  %s6 = ssub.s32 1, %s4
  %s7 = scalar_select 0, %s6, %s4
  $region1: #{tpu_custom_call.1} parent=0
    #allocation2 [shape = 'u8[4096]{0}', space=vmem, size = 0x1000, scoped, tag = 'input window, operand 0, single buffered']
    #allocation3 [shape = 's32[1]{0}', space=sflag, size = 0x4, scoped, tag = 'scoped memory for tpu_custom_call.1']
    #allocation4 [shape = 's32[1]{0}', space=sflag, size = 0x4, scoped, tag = 'scoped memory for tpu_custom_call.1']
    #allocation5 [shape = 'u8[4096]{0}', space=vmem, size = 0x1000, scoped, tag = 'output window, operand 0, single buffered']
    %8 = vsyncpa [#allocation3], 0
    %9 = vsyncpa [#allocation4], 0
    // Predicated region
    $region2: #{tpu_custom_call.1} parent=1 // pred_check
      _
    $region3: #{tpu_custom_call.1} parent=1 // pred_check_branch
      %11 = sbr.rel (0) target = $region5
    $region4: #{tpu_custom_call.1} parent=1 // pred_region
      %s13 = ssub.s32 128, 128
      %14 = vsyncadd [#allocation3], %s13
      %s15 = sshll.u32 [#allocation2], 4
      %s16 = int_to_ptr.vmem [resolvable:$true] %s15
      %21 = dma.hbm_to_vmem [thread:$0]  %s0, 128, %s16, [#allocation3], 64, 64, 4
    $region5: #{tpu_custom_call.1} parent=1 // pred_fallthru
      _
    // Predicated region
    $region6: #{tpu_custom_call.1} parent=1 // pred_check
      _
    $region7: #{tpu_custom_call.1} parent=1 // pred_check_branch
      %23 = sbr.rel (0) target = $region9
    $region8: #{tpu_custom_call.1} parent=1 // pred_region
      _
    $region9: #{tpu_custom_call.1} parent=1 // pred_fallthru
      _
    // Predicated region
    $region10: #{tpu_custom_call.1} parent=1 // pred_check
      _
    $region11: #{tpu_custom_call.1} parent=1 // pred_check_branch
      %25 = sbr.rel (0) target = $region13
    $region12: #{tpu_custom_call.1} parent=1 // pred_region
      _
    $region13: #{tpu_custom_call.1} parent=1 // pred_fallthru
      _
    // Predicated region
    $region14: #{tpu_custom_call.1} parent=1 // pred_check
      _
    $region15: #{tpu_custom_call.1} parent=1 // pred_check_branch
      %27 = sbr.rel (0) target = $region17
    $region16: #{tpu_custom_call.1} parent=1 // pred_region
      %28 = dma.done [#allocation3], 128
    $region17: #{tpu_custom_call.1} parent=1 // pred_fallthru
      _
    %v29 = vld [vmem:[#allocation2] sm:$0xf]
    %v30 = vld [vmem:[#allocation2 + $0x4] sm:$0xf]
    %v31 = vunpack.c.l.bf16 %v29
    %v32 = vunpack.c.l.bf16 %v30
    %33 = vadd.xlane.f32.xlu0 %v31
    %v34 = vpop.xlane.xlu0 %33
    %35 = vadd.xlane.f32.xlu0 %v32
    %v36 = vpop.xlane.xlu0 %35
    %v37 = vrcp.pop 128.0
    %v38 = vmul.f32 %v34, %v37
    %v39 = vmul.f32 %v36, %v37
    %v40 = vsub.f32 %v31, %v38
    %v41 = vsub.f32 %v32, %v39
    %v42 = vmul.f32 %v40, %v40
    %v43 = vmul.f32 %v41, %v41
    %44 = vadd.xlane.f32.xlu0 %v42
    %v45 = vpop.xlane.xlu0 %44
    %46 = vadd.xlane.f32.xlu0 %v43
    %v47 = vpop.xlane.xlu0 %46
    %v48 = vmul.f32 %v45, %v37
    %v49 = vmul.f32 %v47, %v37
    %v50 = vadd.f32 %v48, 1e-12
    %v51 = vadd.f32 %v49, 1e-12
    %v52 = vrsqrt.pop %v50
    %v53 = vrsqrt.pop %v51
    %v54 = vmul.f32 %v40, %v52
    %v55 = vmul.f32 %v41, %v53
    %v56 = vld [vmem:[%s1] sm:$0x1]
    %v58 = vlaneseq
    %v59 = vshrl.u32 %v58, 7
    %v60 = vsub.s32 0, %v59
    %v61 = vrot.slane %v56, %v60
    %v63 = vmul.f32 %v54, %v61
    %v64 = vmul.f32 %v55, %v61
    %v65 = vld [vmem:[%s2] sm:$0x1]
    %v67 = vlaneseq
    %v68 = vshrl.u32 %v67, 7
    %v69 = vsub.s32 0, %v68
    %v70 = vrot.slane %v65, %v69
    %v72 = vadd.f32 %v63, %v70
    %v73 = vadd.f32 %v64, %v70
    %v74 = vpack.c.bf16 %v73, %v72
    %v76 = vunpack.c.l.b16 %v74
    %v77 = vunpack.c.h.b16 %v74
    %v78 = vpack.c.b16 %v76, %v76
    %v79 = vpack.c.b16 %v77, %v77
    %82 = vst [vmem:[#allocation5] sm:$0xf] %v78
    %83 = vst [vmem:[#allocation5 + $0x4] sm:$0xf] %v79
    // Predicated region
    $region18: #{tpu_custom_call.1} parent=1 // pred_check
      _
    $region19: #{tpu_custom_call.1} parent=1 // pred_check_branch
      %85 = sbr.rel (0) target = $region21
    $region20: #{tpu_custom_call.1} parent=1 // pred_region
      %s87 = ssub.s32 128, 128
      %88 = vsyncadd [#allocation4], %s87
      %s89 = sshll.u32 [#allocation5], 4
      %s90 = int_to_ptr.vmem [resolvable:$true] %s89
      %95 = dma.vmem_to_hbm [thread:$0]  %s90, 128, %s3, [#allocation4], 64, 64, 4
    $region21: #{tpu_custom_call.1} parent=1 // pred_fallthru
      _
    // Predicated region
    $region22: #{tpu_custom_call.1} parent=1 // pred_check
      _
    $region23: #{tpu_custom_call.1} parent=1 // pred_check_branch
      %97 = sbr.rel (0) target = $region25
    $region24: #{tpu_custom_call.1} parent=1 // pred_region
      %98 = dma.done [#allocation4], 128
    $region25: #{tpu_custom_call.1} parent=1 // pred_fallthru
      _
    %99 = vsyncpa [#allocation3], 1
    %100 = vsyncpa [#allocation4], 1

</llo_original>
